<compile_context>
chip_gen: v7x
topology: tpu7x:2x2x1
jax: 0.10.0
libtpu: 0.0.40
codegen_flags: <defaults>
</compile_context>

<pallas_src>
import jax
import jax.numpy as jnp
from jax.experimental import pallas as pl
from jax.experimental.pallas import tpu as pltpu


def _round_up(a, b):
    return ((a + b - 1) // b) * b


def _pick_tile(num_packed_rows, target=1024):
    """Row tile (multiple of 8 sublanes).  Large tiles amortise the ~0.35us
    per-grid-step overhead; small problems still get >=2 grid steps (v7x)."""
    mp = _round_up(num_packed_rows, 8)
    if mp <= 8:
        return 8
    if mp >= 2 * target:
        return target
    return max(8, _round_up(pl.cdiv(mp, 2), 8))


def _make_s6_kernel(d_lanes, r_lanes):
    """d_lanes = pack * d_inner (x/delta/y width), r_lanes = pack * state_size."""

    def kernel(x_ref, w_ref, b_ref, s_ref, y_ref):
        x = x_ref[...].astype(jnp.float32)                          # (TM, d_lanes)
        # One fused (block-diagonal) matmul: columns = [delta_pre | B | C].
        z = jnp.dot(x, w_ref[...], preferred_element_type=jnp.float32) + b_ref[...]
        delta = jax.nn.softplus(z[:, :d_lanes])                     # (TM, d_lanes)
        bc = z[:, d_lanes:]                                         # (TM, 2*r_lanes)
        prod = bc[:, :r_lanes] * bc[:, r_lanes:]                    # B*C per logical row
        # Segmented sum over the state axis + broadcast back to d_inner lanes,
        # expressed as one small matmul with a constant 0/1 scatter matrix.
        s = jnp.dot(prod, s_ref[...], preferred_element_type=jnp.float32)  # (TM, d_lanes)
        # h starts at zero, so y = x * delta * sum_r(B*C).
        y_ref[...] = (x * delta * s).astype(y_ref.dtype)

    return kernel


def s6_forward(x, w1, b1, w2, b2, w3, b3, *, target_tile=1024):
    """x: (batch, seq, num_nodes, d_inner); weights in nn.Linear layout (out, in)."""
    bsz, seq, nodes, d_inner = x.shape
    state = w2.shape[0]
    dtype = x.dtype
    M = bsz * seq * nodes

    # ---- lane packing: `pack` logical rows share one 128-lane row ----
    pack = 128 // d_inner if (d_inner <= 128 and 128 % d_inner == 0) else 1
    d_lanes = pack * d_inner            # x / delta / y lane width (128 for d_inner=32)
    r_lanes = pack * state              # B (and C) lane width

    # ---- fused, block-diagonal weights (built once, outside the kernel) ----
    eye = jnp.eye(pack, dtype=jnp.float32)
    w1bd = jnp.kron(eye, w1.T.astype(jnp.float32))      # (d_lanes, d_lanes)
    w2bd = jnp.kron(eye, w2.T.astype(jnp.float32))      # (d_lanes, r_lanes)
    w3bd = jnp.kron(eye, w3.T.astype(jnp.float32))      # (d_lanes, r_lanes)
    w_all = jnp.concatenate([w1bd, w2bd, w3bd], axis=1)  # (d_lanes, d_lanes + 2*r_lanes)
    b_all = jnp.concatenate(
        [jnp.tile(b1, pack), jnp.tile(b2, pack), jnp.tile(b3, pack)]
    ).astype(jnp.float32)[None, :]                       # (1, d_lanes + 2*r_lanes)
    # segmented-sum-and-broadcast matrix: (r_lanes, d_lanes), block-diagonal ones.
    smat = jnp.kron(eye, jnp.ones((state, d_inner), jnp.float32))

    # ---- choose tile as a function of M; pad with zero rows (exactly-zero y) ----
    mp = pl.cdiv(M, pack)                     # packed rows actually needed
    tile = _pick_tile(mp, target_tile)
    mp_pad = _round_up(mp, tile)
    rows_pad = mp_pad * pack

    x2d = x.reshape(M, d_inner)
    if rows_pad != M:
        x2d = jnp.pad(x2d, ((0, rows_pad - M), (0, 0)))
    xp = x2d.reshape(mp_pad, d_lanes)         # free row-major reinterpretation

    out_w = d_lanes + 2 * r_lanes
    grid = (mp_pad // tile,)
    rows = lambda i: (i, 0)
    full = lambda i: (0, 0)

    # NOTE: the three constant operands (weight/bias/scatter) keep a fixed block
    # index, so the pipeline keeps them resident; their double-buffer cost is
    # ~300 KiB total, negligible vs. the VMEM budget even on v7x.
    yp = pl.pallas_call(
        _make_s6_kernel(d_lanes, r_lanes),
        out_shape=jax.ShapeDtypeStruct((mp_pad, d_lanes), dtype),
        grid_spec=pltpu.PrefetchScalarGridSpec(
            num_scalar_prefetch=0,
            grid=grid,
            in_specs=[
                pl.BlockSpec((tile, d_lanes), rows),      # packed x tile
                pl.BlockSpec((d_lanes, out_w), full),     # fused block-diag weight
                pl.BlockSpec((1, out_w), full),           # fused bias row
                pl.BlockSpec((r_lanes, d_lanes), full),   # segmented-sum matrix
            ],
            out_specs=pl.BlockSpec((tile, d_lanes), rows),
        ),
        compiler_params=pltpu.CompilerParams(
            dimension_semantics=("parallel",)),
    )(xp, w_all, b_all, smat)

    y2d = yp.reshape(rows_pad, d_inner)[:M]
    return y2d.reshape(bsz, seq, nodes, d_inner)


def s6_reference(x, w1, b1, w2, b2, w3, b3):
    """Pure-JAX reference mirroring the PyTorch forward (h initialized to 0)."""
    B = jnp.einsum('blnd,rd->blnr', x, w2) + b2
    C = jnp.einsum('blnd,rd->blnr', x, w3) + b3
    delta = jax.nn.softplus(jnp.einsum('blnd,ed->blne', x, w1) + b1)
    dB = jnp.einsum('blnd,blnr->blndr', delta, B)
    h = x[..., None] * dB                      # dA * 0 term dropped (h starts at zero)
    y = jnp.einsum('blnr,blndr->blnd', C, h)
    return y


if __name__ == "__main__":
    # Small shapes consistent with the module.
    batch, seq_len, num_nodes = 2, 8, 4
    d_inner, state_size = 32, 16

    key = jax.random.PRNGKey(0)
    kx, k1, k2, k3, kb1, kb2, kb3 = jax.random.split(key, 7)

    x = jax.random.normal(kx, (batch, seq_len, num_nodes, d_inner), dtype=jnp.float32)

    # Deterministic parameter init (nn.Linear: weight (out, in), bias (out,)).
    w1 = jax.random.normal(k1, (d_inner, d_inner), dtype=jnp.float32) * 0.1
    w2 = jax.random.normal(k2, (state_size, d_inner), dtype=jnp.float32) * 0.1
    w3 = jax.random.normal(k3, (state_size, d_inner), dtype=jnp.float32) * 0.1
    b1 = jax.random.normal(kb1, (d_inner,), dtype=jnp.float32) * 0.01
    b2 = jax.random.normal(kb2, (state_size,), dtype=jnp.float32) * 0.01
    b3 = jax.random.normal(kb3, (state_size,), dtype=jnp.float32) * 0.01

    y = s6_forward(x, w1, b1, w2, b2, w3, b3)
    y = jax.block_until_ready(y)

    y_ref = s6_reference(x, w1, b1, w2, b2, w3, b3)
    assert y.shape == y_ref.shape, "shape mismatch vs reference"
    assert jnp.allclose(y, y_ref, atol=1e-4, rtol=1e-4), "mismatch vs reference"

    print("KERNEL_OK")
</pallas_src>

<mosaic_0001>
module attributes {stable_mosaic.version = 11 : i64} {
  func.func @kernel(%arg0: i32, %arg1: memref<8x128xf32, #tpu.memory_space<vmem>>, %arg2: memref<128x256xf32, #tpu.memory_space<vmem>>, %arg3: memref<1x256xf32, #tpu.memory_space<vmem>>, %arg4: memref<64x128xf32, #tpu.memory_space<vmem>>, %arg5: memref<8x128xf32, #tpu.memory_space<vmem>>) attributes {dimension_semantics = [#tpu.dimension_semantics<parallel>], iteration_bounds = array<i64: 2>, scalar_prefetch = 0 : i64, scratch_operands = 0 : i64, tpu.core_type = #tpu.core_type<tc>, window_params = [{transform_indices = @transform_0, window_bounds = array<i64: 8, 128>}, {pipeline_mode = #tpu.pipeline_mode<synchronous>, transform_indices = @transform_1, window_bounds = array<i64: 128, 256>}, {pipeline_mode = #tpu.pipeline_mode<synchronous>, transform_indices = @transform_2, window_bounds = array<i64: 1, 256>}, {pipeline_mode = #tpu.pipeline_mode<synchronous>, transform_indices = @transform_3, window_bounds = array<i64: 64, 128>}, {transform_indices = @transform_4, window_bounds = array<i64: 8, 128>}]} {
    %c0 = arith.constant 0 : index
    %c0_0 = arith.constant 0 : index
    %0 = vector.load %arg1[%c0, %c0_0] : memref<8x128xf32, #tpu.memory_space<vmem>>, vector<8x128xf32>
    %c0_1 = arith.constant 0 : index
    %c0_2 = arith.constant 0 : index
    %1 = vector.load %arg2[%c0_1, %c0_2] : memref<128x256xf32, #tpu.memory_space<vmem>>, vector<128x256xf32>
    %cst = arith.constant dense<0.000000e+00> : vector<8x256xf32>
    %2 = tpu.matmul %0, %1, %cst {dimension_numbers = #tpu.dot_dimension_numbers<[1], [0], [0], [1], [0, 0, 1, 1], [], []>} : vector<8x128xf32>, vector<128x256xf32>, vector<8x256xf32> -> vector<8x256xf32>
    %c0_3 = arith.constant 0 : index
    %c0_4 = arith.constant 0 : index
    %3 = vector.load %arg3[%c0_3, %c0_4] : memref<1x256xf32, #tpu.memory_space<vmem>>, vector<1x256xf32>
    %4 = vector.broadcast %3 : vector<1x256xf32> to vector<8x256xf32>
    %5 = arith.addf %2, %4 : vector<8x256xf32>
    %6 = vector.extract_strided_slice %5 {offsets = [0, 0], sizes = [8, 128], strides = [1, 1]} : vector<8x256xf32> to vector<8x128xf32>
    %cst_5 = arith.constant 0.000000e+00 : f32
    %7 = vector.broadcast %cst_5 : f32 to vector<8x128xf32>
    %8 = arith.maximumf %6, %7 : vector<8x128xf32>
    %9 = vector.broadcast %cst_5 : f32 to vector<8x128xf32>
    %10 = arith.subf %6, %9 : vector<8x128xf32>
    %11 = arith.cmpf one, %10, %10 : vector<8x128xf32>
    %12 = vector.broadcast %cst_5 : f32 to vector<8x128xf32>
    %13 = arith.addf %6, %12 : vector<8x128xf32>
    %14 = math.absf %10 : vector<8x128xf32>
    %cst_6 = arith.constant 0.000000e+00 : f32
    %15 = vector.broadcast %cst_6 : f32 to vector<8x128xf32>
    %16 = arith.subf %15, %14 : vector<8x128xf32>
    %17 = math.exp %16 : vector<8x128xf32>
    %18 = math.log1p %17 : vector<8x128xf32>
    %19 = arith.addf %8, %18 : vector<8x128xf32>
    %20 = arith.select %11, %13, %19 : vector<8x128xi1>, vector<8x128xf32>
    %21 = vector.extract_strided_slice %5 {offsets = [0, 128], sizes = [8, 128], strides = [1, 1]} : vector<8x256xf32> to vector<8x128xf32>
    %22 = vector.extract_strided_slice %21 {offsets = [0, 0], sizes = [8, 64], strides = [1, 1]} : vector<8x128xf32> to vector<8x64xf32>
    %23 = vector.extract_strided_slice %21 {offsets = [0, 64], sizes = [8, 64], strides = [1, 1]} : vector<8x128xf32> to vector<8x64xf32>
    %24 = arith.mulf %22, %23 : vector<8x64xf32>
    %c0_7 = arith.constant 0 : index
    %c0_8 = arith.constant 0 : index
    %25 = vector.load %arg4[%c0_7, %c0_8] : memref<64x128xf32, #tpu.memory_space<vmem>>, vector<64x128xf32>
    %cst_9 = arith.constant dense<0.000000e+00> : vector<8x128xf32>
    %26 = tpu.matmul %24, %25, %cst_9 {dimension_numbers = #tpu.dot_dimension_numbers<[1], [0], [0], [1], [0, 0, 1, 1], [], []>} : vector<8x64xf32>, vector<64x128xf32>, vector<8x128xf32> -> vector<8x128xf32>
    %27 = arith.mulf %0, %20 : vector<8x128xf32>
    %28 = arith.mulf %27, %26 : vector<8x128xf32>
    %c0_10 = arith.constant 0 : index
    %c0_11 = arith.constant 0 : index
    %29 = vector.load %arg5[%c0_10, %c0_11] : memref<8x128xf32, #tpu.memory_space<vmem>>, vector<8x128xf32>
    tpu.vector_store %arg5[%c0_10, %c0_11], %28 {strides = array<i32>} : memref<8x128xf32, #tpu.memory_space<vmem>>, vector<8x128xf32>,
    return
  }
  func.func @transform_0(%arg0: i32) -> (i32, i32) {
    %c0_i32 = arith.constant 0 : i32
    %c0_i32_0 = arith.constant 0 : i32
    return %arg0, %c0_i32 : i32, i32
  }
  func.func @transform_1(%arg0: i32) -> (i32, i32) {
    %c0_i32 = arith.constant 0 : i32
    %c0_i32_0 = arith.constant 0 : i32
    %c0_i32_1 = arith.constant 0 : i32
    return %c0_i32, %c0_i32_0 : i32, i32
  }
  func.func @transform_2(%arg0: i32) -> (i32, i32) {
    %c0_i32 = arith.constant 0 : i32
    %c0_i32_0 = arith.constant 0 : i32
    %c0_i32_1 = arith.constant 0 : i32
    return %c0_i32, %c0_i32_0 : i32, i32
  }
  func.func @transform_3(%arg0: i32) -> (i32, i32) {
    %c0_i32 = arith.constant 0 : i32
    %c0_i32_0 = arith.constant 0 : i32
    %c0_i32_1 = arith.constant 0 : i32
    return %c0_i32, %c0_i32_0 : i32, i32
  }
  func.func @transform_4(%arg0: i32) -> (i32, i32) {
    %c0_i32 = arith.constant 0 : i32
    %c0_i32_0 = arith.constant 0 : i32
    return %arg0, %c0_i32 : i32, i32
  }
}

</mosaic_0001>

<llo_original>
// kernel: tpu_custom_call.1
$region0: #{tpu_custom_call.1}
  #allocation0 [shape = 'u32[]', space=smem, size = 0x4, offset = 0x4, fixed_abs, tag = 'smem constant byte address 0x4 - core index']
  #allocation1 [shape = 'u32[144,128]{1,0:T(1,128)}', space=vmem, size = 0x12000, scoped, tag = 'internal scratch']
  %s0 = inlined_call_operand.hbm [shape: f32[16,128], index: 0, kind: input, shape index: {}]
  %s1 = inlined_call_operand.hbm [shape: f32[128,256], index: 1, kind: input, shape index: {}]
  %s2 = inlined_call_operand.vmem [shape: f32[1,256], index: 2, kind: input, shape index: {}]
  %s3 = inlined_call_operand.hbm [shape: f32[64,128], index: 3, kind: input, shape index: {}]
  %s4 = inlined_call_operand.hbm [shape: f32[16,128], index: 4, kind: output, shape index: {}]
  %s5 = sld [smem:[#allocation0]]
  $region61: #{tpu_custom_call.1} parent=0
    _
  %s7 = ssub.s32 1, %s5
  %s8 = scalar_select 0, %s7, %s5
  $region1: #{tpu_custom_call.1} parent=0
    #allocation2 [shape = 'u8[8192]{0}', space=vmem, size = 0x2000, scoped, tag = 'input window, operand 0']
    #allocation3 [shape = 's32[2]{0}', space=sflag, size = 0x8, scoped, tag = 'scoped memory for tpu_custom_call.1']
    #allocation4 [shape = 's32[2]{0}', space=sflag, size = 0x8, scoped, tag = 'scoped memory for tpu_custom_call.1']
    #allocation5 [shape = 'u8[131072]{0}', space=vmem, size = 0x20000, scoped, tag = 'input window, operand 1, single buffered']
    #allocation6 [shape = 's32[1]{0}', space=sflag, size = 0x4, scoped, tag = 'scoped memory for tpu_custom_call.1']
    #allocation7 [shape = 'u8[32768]{0}', space=vmem, size = 0x8000, scoped, tag = 'input window, operand 3, single buffered']
    #allocation8 [shape = 'u8[8192]{0}', space=vmem, size = 0x2000, scoped, tag = 'output window, operand 0']
    %9 = vsyncpa [#allocation3], 0
    %s10 = scalar_lea.sflag [#allocation3], 1
    %11 = vsyncpa %s10, 0
    %12 = vsyncpa [#allocation6], 0
    %13 = vsyncpa [#allocation4], 0
    %s14 = scalar_lea.sflag [#allocation4], 1
    %15 = vsyncpa %s14, 0
    loop: start=0, step=1, limit=4
    $region2: #{tpu_custom_call.1} parent=1 // loop_pre_header
      _
    $region3: #{tpu_custom_call.1} parent=1 // loop_header
      %s17 = sphi 0, %s21
      %p18 = scmp.ge.s32.totalorder %s17, 4
      %s27 = sphi 0, %s29
      %s30 = sphi 0, %s27
      %s31 = sphi 0, %s30
      %s47 = sphi 0, %s31
      %s51 = sphi 0, %s51
      %s53 = sphi 0, %s51
      %s54 = sphi 0, %s53
      %s68 = sphi 0, %s54
      %s72 = sphi 0, %s72
      %s74 = sphi 0, %s72
      %s75 = sphi 0, %s74
      %s89 = sphi 0, %s75
      %s93 = sphi 0, %s93
      %s95 = sphi 0, %s93
      %s96 = sphi 0, %s95
      %s110 = sphi 0, %s96
      %s116 = sphi 0, %s118
      %s119 = sphi 0, %s116
      %s120 = sphi 0, %s119
      %s136 = sphi 0, %s120
    $region4: #{tpu_custom_call.1} parent=1 // loop_header_branch
      %20 = sbr.rel (%p18) target = $region8
    $region5: #{tpu_custom_call.1} parent=1 // loop_body
      %s22 = ssub.s32 %s17, 1
      %s23 = ssub.s32 %s17, 2
      %s24 = sadd.s32 %s17, 1
      %s25 = ssub.s32 %s17, %s24
      %p26 = scmp.eq.s32.totalorder %s25, 0
      %s28 = sadd.s32 %s27, 1
      %s29 = scalar_select %p26, %s27, %s28
      %p32 = pneg %p26
      %p33 = scmp.eq.s32.totalorder %s17, 1
      %p34 = por %p32, %p33
      %p35 = scmp.ne.s32.totalorder %s27, %s30
      %p36 = scmp.eq.s32.totalorder %s17, 0
      %p37 = por %p35, %p36
      %p38 = scmp.ne.s32.totalorder %s27, %s30
      %p39 = scmp.eq.s32.totalorder %s22, 1
      %p40 = por %p38, %p39
      %p41 = scmp.ne.s32.totalorder %s30, %s31
      %p42 = scmp.eq.s32.totalorder %s22, 0
      %p43 = por %p41, %p42
      %p44 = scmp.ne.s32.totalorder %s30, %s31
      %p45 = scmp.eq.s32.totalorder %s23, 1
      %p46 = por %p44, %p45
      %p48 = scmp.ne.s32.totalorder %s31, %s47
      %p49 = scmp.eq.s32.totalorder %s23, 0
      %p50 = por %p48, %p49
      %s52 = sadd.s32 %s51, 1
      %p55 = scmp.eq.s32.totalorder %s17, 1
      %p56 = scmp.ne.s32.totalorder %s51, %s53
      %p57 = scmp.eq.s32.totalorder %s17, 0
      %p58 = por %p56, %p57
      %p59 = scmp.ne.s32.totalorder %s51, %s53
      %p60 = scmp.eq.s32.totalorder %s22, 1
      %p61 = por %p59, %p60
      %p62 = scmp.ne.s32.totalorder %s53, %s54
      %p63 = scmp.eq.s32.totalorder %s22, 0
      %p64 = por %p62, %p63
      %p65 = scmp.ne.s32.totalorder %s53, %s54
      %p66 = scmp.eq.s32.totalorder %s23, 1
      %p67 = por %p65, %p66
      %p69 = scmp.ne.s32.totalorder %s54, %s68
      %p70 = scmp.eq.s32.totalorder %s23, 0
      %p71 = por %p69, %p70
      %s73 = sadd.s32 %s72, 1
      %p76 = scmp.eq.s32.totalorder %s17, 1
      %p77 = scmp.ne.s32.totalorder %s72, %s74
      %p78 = scmp.eq.s32.totalorder %s17, 0
      %p79 = por %p77, %p78
      %p80 = scmp.ne.s32.totalorder %s72, %s74
      %p81 = scmp.eq.s32.totalorder %s22, 1
      %p82 = por %p80, %p81
      %p83 = scmp.ne.s32.totalorder %s74, %s75
      %p84 = scmp.eq.s32.totalorder %s22, 0
      %p85 = por %p83, %p84
      %p86 = scmp.ne.s32.totalorder %s74, %s75
      %p87 = scmp.eq.s32.totalorder %s23, 1
      %p88 = por %p86, %p87
      %p90 = scmp.ne.s32.totalorder %s75, %s89
      %p91 = scmp.eq.s32.totalorder %s23, 0
      %p92 = por %p90, %p91
      %s94 = sadd.s32 %s93, 1
      %p97 = scmp.eq.s32.totalorder %s17, 1
      %p98 = scmp.ne.s32.totalorder %s93, %s95
      %p99 = scmp.eq.s32.totalorder %s17, 0
      %p100 = por %p98, %p99
      %p101 = scmp.ne.s32.totalorder %s93, %s95
      %p102 = scmp.eq.s32.totalorder %s22, 1
      %p103 = por %p101, %p102
      %p104 = scmp.ne.s32.totalorder %s95, %s96
      %p105 = scmp.eq.s32.totalorder %s22, 0
      %p106 = por %p104, %p105
      %p107 = scmp.ne.s32.totalorder %s95, %s96
      %p108 = scmp.eq.s32.totalorder %s23, 1
      %p109 = por %p107, %p108
      %p111 = scmp.ne.s32.totalorder %s96, %s110
      %p112 = scmp.eq.s32.totalorder %s23, 0
      %p113 = por %p111, %p112
      %s114 = ssub.s32 %s17, %s24
      %p115 = scmp.eq.s32.totalorder %s114, 0
      %s117 = sadd.s32 %s116, 1
      %s118 = scalar_select %p115, %s116, %s117
      %p121 = pneg %p115
      %p122 = scmp.eq.s32.totalorder %s17, 1
      %p123 = por %p121, %p122
      %p124 = scmp.ne.s32.totalorder %s116, %s119
      %p125 = scmp.eq.s32.totalorder %s17, 0
      %p126 = por %p124, %p125
      %p127 = scmp.ne.s32.totalorder %s116, %s119
      %p128 = scmp.eq.s32.totalorder %s22, 1
      %p129 = por %p127, %p128
      %p130 = scmp.ne.s32.totalorder %s119, %s120
      %p131 = scmp.eq.s32.totalorder %s22, 0
      %p132 = por %p130, %p131
      %p133 = scmp.ne.s32.totalorder %s119, %s120
      %p134 = scmp.eq.s32.totalorder %s23, 1
      %p135 = por %p133, %p134
      %p137 = scmp.ne.s32.totalorder %s120, %s136
      %p138 = scmp.eq.s32.totalorder %s23, 0
      %p139 = por %p137, %p138
      %p140 = scmp.le.s32.totalorder 1, %s17
      %p141 = scmp.lt.s32.totalorder %s17, 3
      %p142 = pnand %p140, %p141
      %p143 = pneg %p142
      // Predicated region
      $region9: #{tpu_custom_call.1} parent=5 // pred_check
        _
      $region10: #{tpu_custom_call.1} parent=5 // pred_check_branch
        %145 = sbr.rel (%p142) target = $region12
      $region11: #{tpu_custom_call.1} parent=5 // pred_region
        %s146 = ssub.s32 %s17, 1
        // Predicated region
        $region13: #{tpu_custom_call.1} parent=11 // pred_check
          %p147 = pneg %p64
        $region14: #{tpu_custom_call.1} parent=11 // pred_check_branch
          %149 = sbr.rel (%p147) target = $region16
        $region15: #{tpu_custom_call.1} parent=11 // pred_region
          %s151 = ssub.s32 4096, 4096
          %152 = vsyncadd [#allocation6], %s151
          %s153 = sshll.u32 [#allocation5], 4
          %s154 = int_to_ptr.vmem [resolvable:$true] %s153
          %159 = dma.hbm_to_vmem [thread:$0]  %s1, 4096, %s154, [#allocation6], 256, 256, 16
        $region16: #{tpu_custom_call.1} parent=11 // pred_fallthru
          _
        // Predicated region
        $region17: #{tpu_custom_call.1} parent=11 // pred_check
          %p160 = pneg %p85
        $region18: #{tpu_custom_call.1} parent=11 // pred_check_branch
          %162 = sbr.rel (%p160) target = $region20
        $region19: #{tpu_custom_call.1} parent=11 // pred_region
          _
        $region20: #{tpu_custom_call.1} parent=11 // pred_fallthru
          _
        // Predicated region
        $region21: #{tpu_custom_call.1} parent=11 // pred_check
          %p163 = pneg %p106
        $region22: #{tpu_custom_call.1} parent=11 // pred_check_branch
          %165 = sbr.rel (%p163) target = $region24
        $region23: #{tpu_custom_call.1} parent=11 // pred_region
          %s167 = ssub.s32 1024, 1024
          %168 = vsyncadd [#allocation6], %s167
          %s169 = sshll.u32 [#allocation7], 4
          %s170 = int_to_ptr.vmem [resolvable:$true] %s169
          %175 = dma.hbm_to_vmem [thread:$0]  %s3, 1024, %s170, [#allocation6], 128, 128, 8
        $region24: #{tpu_custom_call.1} parent=11 // pred_fallthru
          _
      $region12: #{tpu_custom_call.1} parent=5 // pred_fallthru
        _
      %p176 = scmp.lt.s32.totalorder %s17, 2
      // Predicated region
      $region25: #{tpu_custom_call.1} parent=5 // pred_check
        %p177 = pneg %p176
      $region26: #{tpu_custom_call.1} parent=5 // pred_check_branch
        %179 = sbr.rel (%p177) target = $region28
      $region27: #{tpu_custom_call.1} parent=5 // pred_region
        // Predicated region
        $region29: #{tpu_custom_call.1} parent=27 // pred_check
          %p180 = pneg %p37
        $region30: #{tpu_custom_call.1} parent=27 // pred_check_branch
          %182 = sbr.rel (%p180) target = $region32
        $region31: #{tpu_custom_call.1} parent=27 // pred_region
          %s183 = sand.u32 %s27, 1
          %s184 = scalar_lea.sflag [#allocation3], %s183
          %s185 = sand.u32 %s27, 1
          %s186 = smul.addr %s185, 8
          %s187 = scalar_lea.vmem [#allocation2], %s186
          %s189 = ssub.s32 128, 128
          %190 = vsyncadd %s184, %s189
          %s191 = smul.addr %s17, 128
          %s192 = scalar_lea.hbm %s0, %s191
          %s194 = sshll.u32 %s187, 4
          %s195 = int_to_ptr.vmem [resolvable:$true] %s194
          %197 = dma.hbm_to_vmem [thread:$0]  %s192, 128, %s195, %s184
        $region32: #{tpu_custom_call.1} parent=27 // pred_fallthru
          _
      $region28: #{tpu_custom_call.1} parent=5 // pred_fallthru
        _
      %p198 = scmp.le.s32.totalorder 1, %s17
      %p199 = scmp.lt.s32.totalorder %s17, 3
      %p200 = pnand %p198, %p199
      %p201 = pneg %p200
      // Predicated region
      $region33: #{tpu_custom_call.1} parent=5 // pred_check
        _
      $region34: #{tpu_custom_call.1} parent=5 // pred_check_branch
        %203 = sbr.rel (%p200) target = $region36
      $region35: #{tpu_custom_call.1} parent=5 // pred_region
        %s204 = ssub.s32 %s17, 1
        %s205 = sand.u32 %s30, 1
        %s206 = scalar_lea.sflag [#allocation3], %s205
        %s207 = sand.u32 %s30, 1
        %s208 = smul.addr %s207, 8
        %s209 = scalar_lea.vmem [#allocation2], %s208
        // Predicated region
        $region37: #{tpu_custom_call.1} parent=35 // pred_check
          %p210 = pneg %p43
        $region38: #{tpu_custom_call.1} parent=35 // pred_check_branch
          %212 = sbr.rel (%p210) target = $region40
        $region39: #{tpu_custom_call.1} parent=35 // pred_region
          %213 = dma.done %s206, 128
        $region40: #{tpu_custom_call.1} parent=35 // pred_fallthru
          _
        // Predicated region
        $region41: #{tpu_custom_call.1} parent=35 // pred_check
          %p214 = pneg %p64
        $region42: #{tpu_custom_call.1} parent=35 // pred_check_branch
          %216 = sbr.rel (%p214) target = $region44
        $region43: #{tpu_custom_call.1} parent=35 // pred_region
          %217 = dma.done [#allocation6], 4096
        $region44: #{tpu_custom_call.1} parent=35 // pred_fallthru
          _
        // Predicated region
        $region45: #{tpu_custom_call.1} parent=35 // pred_check
          %p218 = pneg %p106
        $region46: #{tpu_custom_call.1} parent=35 // pred_check_branch
          %220 = sbr.rel (%p218) target = $region48
        $region47: #{tpu_custom_call.1} parent=35 // pred_region
          %221 = dma.done [#allocation6], 1024
        $region48: #{tpu_custom_call.1} parent=35 // pred_fallthru
          _
        %s222 = sand.u32 %s30, 1
        %s223 = scalar_lea.sflag [#allocation3], %s222
        %s224 = sand.u32 %s30, 1
        %s225 = smul.addr %s224, 8
        %s226 = scalar_lea.vmem [#allocation2], %s225
        %p227 = pneg %p43
        %p228 = pneg %p40
        %p229 = pneg %p64
        %p230 = pneg %p61
        %p231 = pneg %p85
        %p232 = pneg %p82
        %p233 = pneg %p106
        %p234 = pneg %p103
        %p235 = pneg %p132
        %p236 = pneg %p129
        %s237 = sand.u32 %s119, 1
        %s238 = scalar_lea.sflag [#allocation4], %s237
        %s239 = sand.u32 %s119, 1
        %s240 = smul.addr %s239, 8
        %s241 = scalar_lea.vmem [#allocation8], %s240
        %v242 = vld [vmem:[%s209] sm:$0xff]
        %v243 = vld [vmem:[#allocation5] sm:$0xff]
        %v244 = vld [vmem:[#allocation5 + $0x8] sm:$0xff]
        %v245 = vld [vmem:[#allocation5 + $0x10] sm:$0xff]
        %v246 = vld [vmem:[#allocation5 + $0x18] sm:$0xff]
        %v247 = vld [vmem:[#allocation5 + $0x20] sm:$0xff]
        %v248 = vld [vmem:[#allocation5 + $0x28] sm:$0xff]
        %v249 = vld [vmem:[#allocation5 + $0x30] sm:$0xff]
        %v250 = vld [vmem:[#allocation5 + $0x38] sm:$0xff]
        %v251 = vld [vmem:[#allocation5 + $0x40] sm:$0xff]
        %v252 = vld [vmem:[#allocation5 + $0x48] sm:$0xff]
        %v253 = vld [vmem:[#allocation5 + $0x50] sm:$0xff]
        %v254 = vld [vmem:[#allocation5 + $0x58] sm:$0xff]
        %v255 = vld [vmem:[#allocation5 + $0x60] sm:$0xff]
        %v256 = vld [vmem:[#allocation5 + $0x68] sm:$0xff]
        %v257 = vld [vmem:[#allocation5 + $0x70] sm:$0xff]
        %v258 = vld [vmem:[#allocation5 + $0x78] sm:$0xff]
        %v259 = vld [vmem:[#allocation5 + $0x80] sm:$0xff]
        %v260 = vld [vmem:[#allocation5 + $0x88] sm:$0xff]
        %v261 = vld [vmem:[#allocation5 + $0x90] sm:$0xff]
        %v262 = vld [vmem:[#allocation5 + $0x98] sm:$0xff]
        %v263 = vld [vmem:[#allocation5 + $0xa0] sm:$0xff]
        %v264 = vld [vmem:[#allocation5 + $0xa8] sm:$0xff]
        %v265 = vld [vmem:[#allocation5 + $0xb0] sm:$0xff]
        %v266 = vld [vmem:[#allocation5 + $0xb8] sm:$0xff]
        %v267 = vld [vmem:[#allocation5 + $0xc0] sm:$0xff]
        %v268 = vld [vmem:[#allocation5 + $0xc8] sm:$0xff]
        %v269 = vld [vmem:[#allocation5 + $0xd0] sm:$0xff]
        %v270 = vld [vmem:[#allocation5 + $0xd8] sm:$0xff]
        %v271 = vld [vmem:[#allocation5 + $0xe0] sm:$0xff]
        %v272 = vld [vmem:[#allocation5 + $0xe8] sm:$0xff]
        %v273 = vld [vmem:[#allocation5 + $0xf0] sm:$0xff]
        %v274 = vld [vmem:[#allocation5 + $0xf8] sm:$0xff]
        %v275 = vld [vmem:[%s2] sm:$0x3]
        %v277 = vlaneseq
        %v278 = vshrl.u32 %v277, 7
        %v279 = vsub.s32 0, %v278
        %v280 = vrot.slane %v275, %v279
        %v281 = vlaneseq
        %v282 = vshrl.u32 %v281, 7
        %v283 = vsub.s32 1, %v282
        %v284 = vrot.slane %v275, %v283
        %287 = vmatprep.subr.mxu0 %v244
        %288 = vmatpush1.msra.mxu0 %v243
        %289 = vmatprep.subr.mxu0 %v246
        %290 = vmatpush1.msra.mxu0 %v245
        %291 = vmatprep.subr.mxu0 %v248
        %292 = vmatpush1.msra.mxu0 %v247
        %293 = vmatprep.subr.mxu0 %v250
        %294 = vmatpush1.msra.mxu0 %v249
        %295 = vmatprep.subr.mxu0 %v252
        %296 = vmatpush1.msra.mxu0 %v251
        %297 = vmatprep.subr.mxu0 %v254
        %298 = vmatpush1.msra.mxu0 %v253
        %299 = vmatprep.subr.mxu0 %v256
        %300 = vmatpush1.msra.mxu0 %v255
        %301 = vmatprep.subr.mxu0 %v258
        %302 = vmatpush1.msra.mxu0 %v257
        %303 = vmatprep.subr.mxu0 %v260
        %304 = vmatpush1.msra.mxu0 %v259
        %305 = vmatprep.subr.mxu0 %v262
        %306 = vmatpush1.msra.mxu0 %v261
        %307 = vmatprep.subr.mxu0 %v264
        %308 = vmatpush1.msra.mxu0 %v263
        %309 = vmatprep.subr.mxu0 %v266
        %310 = vmatpush1.msra.mxu0 %v265
        %311 = vmatprep.subr.mxu0 %v268
        %312 = vmatpush1.msra.mxu0 %v267
        %313 = vmatprep.subr.mxu0 %v270
        %314 = vmatpush1.msra.mxu0 %v269
        %315 = vmatprep.subr.mxu0 %v272
        %316 = vmatpush1.msra.mxu0 %v271
        %317 = vmatprep.subr.mxu0 %v274
        %318 = vmatpush1.msra.mxu0 %v273
        %319 = vmatprep.subr.mxu0 0.0
        %320 = vmatpush1.msra.mxu0 0.0
        %321 = vmatprep.subr.mxu0 0.0
        %322 = vmatpush1.msra.mxu0 0.0
        %323 = vmatprep.subr.mxu0 0.0
        %324 = vmatpush1.msra.mxu0 0.0
        %325 = vmatprep.subr.mxu0 0.0
        %326 = vmatpush1.msra.mxu0 0.0
        %327 = vmatprep.subr.mxu0 0.0
        %328 = vmatpush1.msra.mxu0 0.0
        %329 = vmatprep.subr.mxu0 0.0
        %330 = vmatpush1.msra.mxu0 0.0
        %331 = vmatprep.subr.mxu0 0.0
        %332 = vmatpush1.msra.mxu0 0.0
        %333 = vmatprep.subr.mxu0 0.0
        %334 = vmatpush1.msra.mxu0 0.0
        %335 = vmatprep.subr.mxu0 0.0
        %336 = vmatpush1.msra.mxu0 0.0
        %337 = vmatprep.subr.mxu0 0.0
        %338 = vmatpush1.msra.mxu0 0.0
        %339 = vmatprep.subr.mxu0 0.0
        %340 = vmatpush1.msra.mxu0 0.0
        %341 = vmatprep.subr.mxu0 0.0
        %342 = vmatpush1.msra.mxu0 0.0
        %343 = vmatprep.subr.mxu0 0.0
        %344 = vmatpush1.msra.mxu0 0.0
        %345 = vmatprep.subr.mxu0 0.0
        %346 = vmatpush1.msra.mxu0 0.0
        %347 = vmatprep.subr.mxu0 0.0
        %348 = vmatpush1.msra.mxu0 0.0
        %349 = vmatprep.subr.mxu0 0.0
        %350 = vmatpush1.msra.mxu0 0.0
        %351 = vmatprep.mubr.f32.mxu0 0.0
        %352 = vmatmul.mubr.f32.gmra.mrb[0].mxu0 %v242
        %v353 = vpop.f32.mrb[0].mxu0
        %v354 = vadd.f32 %v280, %v353
        %v355 = vpop.f32.mrb[0].mxu0
        %v356 = vadd.f32 %v284, %v355
        %357 = vdwg.mxu0
        %v358 = vmax.f32 %v354, 0.0
        %vm359 = vcmp.ne.f32.partialorder %v354, %v354
        %v360 = vadd.f32 %v354, 0.0
        %v361 = vand.u32 2147483647, %v354
        %v362 = vsub.f32 0.0, %v361
        %v363 = vmul.f32 %v362, 1.442695
        %v364 = vpow.pop %v363
        %v365 = vadd.f32 %v364, 1.0
        %v366 = vlog2.pop %v365
        %v367 = vmul.f32 %v366, 0.6931472
        %v368 = vmul.f32 -0.5, %v364
        %v369 = vadd.f32 %v368, 1.0
        %v370 = vmul.f32 %v369, %v364
        %v371 = vand.u32 2147483647, %v364
        %vm372 = vcmp.lt.f32.partialorder %v371, 0.0004427343
        %v373 = vsel %vm372, %v370, %v367
        %v374 = vadd.f32 %v358, %v373
        %v375 = vsel %vm359, %v360, %v374
        %377 = vrot.lane.b32.xlu0 %v356, 64
        %v378 = vpop.permute.xlu0 %377
        %v380 = vmul.f32 %v356, %v378
        %v381 = vld [vmem:[#allocation7] sm:$0xff]
        %v382 = vld [vmem:[#allocation7 + $0x8] sm:$0xff]
        %v383 = vld [vmem:[#allocation7 + $0x10] sm:$0xff]
        %v384 = vld [vmem:[#allocation7 + $0x18] sm:$0xff]
        %v385 = vld [vmem:[#allocation7 + $0x20] sm:$0xff]
        %v386 = vld [vmem:[#allocation7 + $0x28] sm:$0xff]
        %v387 = vld [vmem:[#allocation7 + $0x30] sm:$0xff]
        %v388 = vld [vmem:[#allocation7 + $0x38] sm:$0xff]
        %vm389 = vcmask 523264
        %v391 = vsel %vm389, %v380, 0
        %393 = vmatprep.subr.mxu0 0.0
        %394 = vmatpush1.msra.mxu0 %v381
        %395 = vmatprep.subr.mxu0 0.0
        %396 = vmatpush1.msra.mxu0 %v382
        %397 = vmatprep.subr.mxu0 0.0
        %398 = vmatpush1.msra.mxu0 %v383
        %399 = vmatprep.subr.mxu0 0.0
        %400 = vmatpush1.msra.mxu0 %v384
        %401 = vmatprep.subr.mxu0 0.0
        %402 = vmatpush1.msra.mxu0 %v385
        %403 = vmatprep.subr.mxu0 0.0
        %404 = vmatpush1.msra.mxu0 %v386
        %405 = vmatprep.subr.mxu0 0.0
        %406 = vmatpush1.msra.mxu0 %v387
        %407 = vmatprep.subr.mxu0 0.0
        %408 = vmatpush1.msra.mxu0 %v388
        %409 = vmatprep.subr.mxu0 0.0
        %410 = vmatpush1.msra.mxu0 0.0
        %411 = vmatprep.subr.mxu0 0.0
        %412 = vmatpush1.msra.mxu0 0.0
        %413 = vmatprep.subr.mxu0 0.0
        %414 = vmatpush1.msra.mxu0 0.0
        %415 = vmatprep.subr.mxu0 0.0
        %416 = vmatpush1.msra.mxu0 0.0
        %417 = vmatprep.subr.mxu0 0.0
        %418 = vmatpush1.msra.mxu0 0.0
        %419 = vmatprep.subr.mxu0 0.0
        %420 = vmatpush1.msra.mxu0 0.0
        %421 = vmatprep.subr.mxu0 0.0
        %422 = vmatpush1.msra.mxu0 0.0
        %423 = vmatprep.subr.mxu0 0.0
        %424 = vmatpush1.msra.mxu0 0.0
        %425 = vmatprep.subr.mxu0 0.0
        %426 = vmatpush1.msra.mxu0 0.0
        %427 = vmatprep.subr.mxu0 0.0
        %428 = vmatpush1.msra.mxu0 0.0
        %429 = vmatprep.subr.mxu0 0.0
        %430 = vmatpush1.msra.mxu0 0.0
        %431 = vmatprep.subr.mxu0 0.0
        %432 = vmatpush1.msra.mxu0 0.0
        %433 = vmatprep.subr.mxu0 0.0
        %434 = vmatpush1.msra.mxu0 0.0
        %435 = vmatprep.subr.mxu0 0.0
        %436 = vmatpush1.msra.mxu0 0.0
        %437 = vmatprep.subr.mxu0 0.0
        %438 = vmatpush1.msra.mxu0 0.0
        %439 = vmatprep.subr.mxu0 0.0
        %440 = vmatpush1.msra.mxu0 0.0
        %441 = vmatprep.subr.mxu0 0.0
        %442 = vmatpush1.msra.mxu0 0.0
        %443 = vmatprep.subr.mxu0 0.0
        %444 = vmatpush1.msra.mxu0 0.0
        %445 = vmatprep.subr.mxu0 0.0
        %446 = vmatpush1.msra.mxu0 0.0
        %447 = vmatprep.subr.mxu0 0.0
        %448 = vmatpush1.msra.mxu0 0.0
        %449 = vmatprep.subr.mxu0 0.0
        %450 = vmatpush1.msra.mxu0 0.0
        %451 = vmatprep.subr.mxu0 0.0
        %452 = vmatpush1.msra.mxu0 0.0
        %453 = vmatprep.subr.mxu0 0.0
        %454 = vmatpush1.msra.mxu0 0.0
        %455 = vmatprep.subr.mxu0 0.0
        %456 = vmatpush1.msra.mxu0 0.0
        %457 = vmatprep.mubr.f32.mxu0 0.0
        %458 = vmatmul.mubr.f32.gmra.mrb[0].mxu0 %v391
        %v459 = vpop.f32.mrb[0].mxu0
        %v460 = vadd.f32 0.0, %v459
        %v461 = vpop.f32.mrb[0].mxu0
        %462 = vdwg.mxu0
        %v463 = vmul.f32 %v242, %v375
        %v464 = vmul.f32 %v463, %v460
        %465 = vst [vmem:[%s241] sm:$0xff] %v464
        %s466 = sand.u32 %s119, 1
        %s467 = scalar_lea.sflag [#allocation4], %s466
        %s468 = sand.u32 %s119, 1
        %s469 = smul.addr %s468, 8
        %s470 = scalar_lea.vmem [#allocation8], %s469
        // Predicated region
        $region49: #{tpu_custom_call.1} parent=35 // pred_check
          %p471 = pneg %p129
        $region50: #{tpu_custom_call.1} parent=35 // pred_check_branch
          %473 = sbr.rel (%p471) target = $region52
        $region51: #{tpu_custom_call.1} parent=35 // pred_region
          %s475 = ssub.s32 128, 128
          %476 = vsyncadd %s467, %s475
          %s477 = smul.addr %s22, 128
          %s478 = scalar_lea.hbm %s4, %s477
          %s480 = sshll.u32 %s470, 4
          %s481 = int_to_ptr.vmem [resolvable:$true] %s480
          %483 = dma.vmem_to_hbm [thread:$0]  %s481, 128, %s478, %s467
        $region52: #{tpu_custom_call.1} parent=35 // pred_fallthru
          _
      $region36: #{tpu_custom_call.1} parent=5 // pred_fallthru
        _
      %p484 = scmp.le.s32.totalorder 2, %s17
      // Predicated region
      $region53: #{tpu_custom_call.1} parent=5 // pred_check
        %p485 = pneg %p484
      $region54: #{tpu_custom_call.1} parent=5 // pred_check_branch
        %487 = sbr.rel (%p485) target = $region56
      $region55: #{tpu_custom_call.1} parent=5 // pred_region
        %s488 = ssub.s32 %s17, 2
        // Predicated region
        $region57: #{tpu_custom_call.1} parent=55 // pred_check
          %p489 = pneg %p135
        $region58: #{tpu_custom_call.1} parent=55 // pred_check_branch
          %491 = sbr.rel (%p489) target = $region60
        $region59: #{tpu_custom_call.1} parent=55 // pred_region
          %s492 = sand.u32 %s120, 1
          %s493 = scalar_lea.sflag [#allocation4], %s492
          %s494 = sand.u32 %s120, 1
          %s495 = smul.addr %s494, 8
          %s496 = scalar_lea.vmem [#allocation8], %s495
          %497 = dma.done %s493, 128
        $region60: #{tpu_custom_call.1} parent=55 // pred_fallthru
          _
      $region56: #{tpu_custom_call.1} parent=5 // pred_fallthru
        _
    $region6: #{tpu_custom_call.1} parent=1 // loop_footer
      %s21 = sadd.s32 1, %s17
    $region7: #{tpu_custom_call.1} parent=1 // loop_footer_branch
      %16 = sbr.rel target = $region3
    $region8: #{tpu_custom_call.1} parent=1 // loop_exit
      _
    %498 = vsyncpa [#allocation3], 1
    %s499 = scalar_lea.sflag [#allocation3], 1
    %500 = vsyncpa %s499, 1
    %501 = vsyncpa [#allocation6], 1
    %502 = vsyncpa [#allocation4], 1
    %s503 = scalar_lea.sflag [#allocation4], 1
    %504 = vsyncpa %s503, 1

</llo_original>
